<compile_context>
chip_gen: v5e
topology: v5e:2x2
jax: 0.10.0
libtpu: 0.0.40
codegen_flags: <defaults>
</compile_context>

<pallas_src>
import jax
import jax.numpy as jnp
from jax.experimental import pallas as pl
from jax.experimental.pallas import tpu as pltpu

HIDDEN = 32
EPS_BN = 1e-5
EPS_COS = 1e-8


def _vmem_spec():
    return pl.BlockSpec(memory_space=pltpu.MemorySpace.VMEM)


# ---------------------------------------------------------------------------
# Fused kernel: input_mlp -> node/gcn projections -> summed scores
# ---------------------------------------------------------------------------
def gcn1_kernel(x_ref, vb_ref, vf_ref,
                w1a_ref, w1b_ref, b1_ref, alpha_ref,
                w2_ref, b2_ref,
                wnp_ref, web_ref, wef_ref, bsum_ref,
                out_ref):
    # ---- input_mlp: Linear(2,32) (BatchNorm1d folded) -> PReLU -> Dropout(0)
    x = x_ref[...]                                    # (N, 2)
    # K=2 is far below an MXU tile; two broadcast multiply-adds on the VPU are
    # cheaper than a padded matmul and avoid any wrapper-side pad of x.
    h = (x[:, 0:1] * w1a_ref[...]
         + x[:, 1:2] * w1b_ref[...]
         + b1_ref[...])                               # (N, 32)
    h = jnp.where(h > 0, h, alpha_ref[...] * h)       # PReLU (shared alpha)
    # Dropout(p=0.0): identity.

    # ---- Linear(32,32): shared node features fed to both graph convs ----
    feat = jnp.dot(h, w2_ref[...],
                   preferred_element_type=jnp.float32) + b2_ref[...]   # (N,32)

    n = feat.shape[0]
    # Fold the 1/n mean-normalization of the cosine adjacency into the (N,32)
    # aggregation operand (32*N mults) instead of scaling the (N,N) adjacency.
    feat_scaled = feat * (1.0 / n)

    def cos_aggregate(v):
        # TODO(synk): CMCosConv source is not part of the provided module;
        # assumed semantics: cosine-similarity adjacency (self-loops and
        # negative similarities kept), mean (1/n) normalized aggregation, then
        # a Linear(32,32) transform (folded into the score weights below).
        inv_norm = jax.lax.rsqrt(jnp.sum(v * v, axis=-1, keepdims=True) + EPS_COS)
        vhat = v * inv_norm                           # (N, Dv)
        adj = jax.lax.dot_general(vhat, vhat, (((1,), (1,)), ((), ())),
                                  preferred_element_type=jnp.float32)  # (N, N)
        # For production graph sizes (N >> 2*HIDDEN, Dv up to 2048) reassociate
        # as vhat @ (vhat.T @ feat_scaled) and tile over node blocks instead of
        # materializing the (N, N) adjacency in VMEM (esp. on v7x's 64 MiB).
        return jnp.dot(adj, feat_scaled, preferred_element_type=jnp.float32)

    agg_b = cos_aggregate(vb_ref[...])                # (N, 32)
    agg_f = cos_aggregate(vf_ref[...])                # (N, 32)

    # ---- node / body / face score projections + final 3-way sum ----
    # Each CMCosConv Linear(32,32) is folded into its gcn_projection (exact:
    # conv_activation=None, dropout=0), so each branch is one (N,32)@(32,1).
    total = (jnp.dot(feat, wnp_ref[...], preferred_element_type=jnp.float32)
             + jnp.dot(agg_b, web_ref[...], preferred_element_type=jnp.float32)
             + jnp.dot(agg_f, wef_ref[...], preferred_element_type=jnp.float32)
             + bsum_ref[...])                         # (N, 1)
    out_ref[...] = total


# ---------------------------------------------------------------------------
# Parameter init (deterministic, PyTorch-Linear-style uniform bounds)
# ---------------------------------------------------------------------------
def _linear_init(key, fan_in, fan_out):
    kw, kb = jax.random.split(key)
    bound = 1.0 / jnp.sqrt(jnp.float32(fan_in))
    w = jax.random.uniform(kw, (fan_in, fan_out), jnp.float32, -bound, bound)
    b = jax.random.uniform(kb, (1, fan_out), jnp.float32, -bound, bound)
    return w, b


def init_params(key):
    ks = jax.random.split(key, 8)
    p = {}
    p["w1"], p["b1"] = _linear_init(ks[0], 2, HIDDEN)              # Linear(2,32)
    p["gamma"] = jnp.ones((1, HIDDEN), jnp.float32)                # BatchNorm1d(32)
    p["beta"] = jnp.zeros((1, HIDDEN), jnp.float32)
    p["mean"] = jnp.zeros((1, HIDDEN), jnp.float32)
    p["var"] = jnp.ones((1, HIDDEN), jnp.float32)
    p["alpha"] = jnp.full((1, 1), 0.25, jnp.float32)               # PReLU
    p["w2"], p["b2"] = _linear_init(ks[1], HIDDEN, HIDDEN)         # Linear(32,32)
    p["wnp"], p["bnp"] = _linear_init(ks[2], HIDDEN, 1)            # node_projection
    p["w_body"], p["b_body"] = _linear_init(ks[3], HIDDEN, HIDDEN)  # CMCosConv body
    p["w_face"], p["b_face"] = _linear_init(ks[4], HIDDEN, HIDDEN)  # CMCosConv face
    p["wpb"], p["bpb"] = _linear_init(ks[5], HIDDEN, 1)            # gcn_projection_body
    p["wpf"], p["bpf"] = _linear_init(ks[6], HIDDEN, 1)            # gcn_projection_face
    return p


def fuse_params(p):
    """One-time (hoisted) weight preparation; nothing here runs per forward."""
    # Fold BatchNorm1d (inference running stats) into Linear(2,32).
    s = p["gamma"] * jax.lax.rsqrt(p["var"] + EPS_BN)              # (1, 32)
    w1f = p["w1"] * s                                              # (2, 32)
    b1f = (p["b1"] - p["mean"]) * s + p["beta"]                    # (1, 32)
    # Fold each CMCosConv Linear(32,32) into its gcn_projection Linear(32,1).
    web = p["w_body"] @ p["wpb"]                                   # (32, 1)
    beb = p["b_body"] @ p["wpb"] + p["bpb"]                        # (1, 1)
    wef = p["w_face"] @ p["wpf"]                                   # (32, 1)
    bef = p["b_face"] @ p["wpf"] + p["bpf"]                        # (1, 1)
    return {
        "w1a": w1f[0:1, :], "w1b": w1f[1:2, :], "b1": b1f,
        "alpha": p["alpha"],
        "w2": p["w2"], "b2": p["b2"],
        "wnp": p["wnp"], "web": web, "wef": wef,
        "bsum": p["bnp"] + beb + bef,                              # (1, 1)
    }


# ---------------------------------------------------------------------------
# Forward wrapper — one fused pallas_call, no per-call pads / glue
# ---------------------------------------------------------------------------
def gcn1_forward(x, v_body, v_face, fp):
    n = x.shape[0]
    total = pl.pallas_call(
        gcn1_kernel,
        out_shape=jax.ShapeDtypeStruct((n, 1), jnp.float32),
        in_specs=[_vmem_spec()] * 13,
        out_specs=_vmem_spec(),
    )(x, v_body, v_face,
      fp["w1a"], fp["w1b"], fp["b1"], fp["alpha"],
      fp["w2"], fp["b2"],
      fp["wnp"], fp["web"], fp["wef"], fp["bsum"])
    return jnp.squeeze(total, axis=-1)


if __name__ == "__main__":
    key = jax.random.PRNGKey(0)
    kx, kvb, kvf, kp = jax.random.split(key, 4)

    N = 16            # graph nodes
    VIS_BODY = 128    # small stand-in for visual_dim=2048
    VIS_FACE = 64     # small stand-in for face visual_dim=512

    x = jax.random.normal(kx, (N, 2), jnp.float32)           # batch_graph.x
    v_body = jax.random.normal(kvb, (N, VIS_BODY), jnp.float32)
    v_face = jax.random.normal(kvf, (N, VIS_FACE), jnp.float32)

    raw_params = init_params(kp)
    fused_params = fuse_params(raw_params)    # hoisted once, off the fwd path

    fwd = jax.jit(gcn1_forward)
    out = fwd(x, v_body, v_face, fused_params)
    jax.block_until_ready(out)
    assert out.shape == (N,)
    print("KERNEL_OK")
</pallas_src>

<mosaic_0001>
module attributes {stable_mosaic.version = 11 : i64} {
  func.func @gcn1_kernel(%arg0: memref<16x2xf32, #tpu.memory_space<vmem>>, %arg1: memref<16x128xf32, #tpu.memory_space<vmem>>, %arg2: memref<16x64xf32, #tpu.memory_space<vmem>>, %arg3: memref<1x32xf32, #tpu.memory_space<vmem>>, %arg4: memref<1x32xf32, #tpu.memory_space<vmem>>, %arg5: memref<1x32xf32, #tpu.memory_space<vmem>>, %arg6: memref<1x1xf32, #tpu.memory_space<vmem>>, %arg7: memref<32x32xf32, #tpu.memory_space<vmem>>, %arg8: memref<1x32xf32, #tpu.memory_space<vmem>>, %arg9: memref<32x1xf32, #tpu.memory_space<vmem>>, %arg10: memref<32x1xf32, #tpu.memory_space<vmem>>, %arg11: memref<32x1xf32, #tpu.memory_space<vmem>>, %arg12: memref<1x1xf32, #tpu.memory_space<vmem>>, %arg13: memref<16x1xf32, #tpu.memory_space<vmem>>) attributes {dimension_semantics = [], scalar_prefetch = 0 : i64, scratch_operands = 0 : i64, tpu.core_type = #tpu.core_type<tc>} {
    %c0 = arith.constant 0 : index
    %c0_0 = arith.constant 0 : index
    %0 = vector.load %arg0[%c0, %c0_0] : memref<16x2xf32, #tpu.memory_space<vmem>>, vector<16x2xf32>
    %1 = vector.extract_strided_slice %0 {offsets = [0, 0], sizes = [16, 1], strides = [1, 1]} : vector<16x2xf32> to vector<16x1xf32>
    %c0_1 = arith.constant 0 : index
    %c0_2 = arith.constant 0 : index
    %2 = vector.load %arg3[%c0_1, %c0_2] : memref<1x32xf32, #tpu.memory_space<vmem>>, vector<1x32xf32>
    %3 = vector.broadcast %1 : vector<16x1xf32> to vector<16x32xf32>
    %4 = vector.broadcast %2 : vector<1x32xf32> to vector<16x32xf32>
    %5 = arith.mulf %3, %4 : vector<16x32xf32>
    %6 = vector.extract_strided_slice %0 {offsets = [0, 1], sizes = [16, 1], strides = [1, 1]} : vector<16x2xf32> to vector<16x1xf32>
    %c0_3 = arith.constant 0 : index
    %c0_4 = arith.constant 0 : index
    %7 = vector.load %arg4[%c0_3, %c0_4] : memref<1x32xf32, #tpu.memory_space<vmem>>, vector<1x32xf32>
    %8 = vector.broadcast %6 : vector<16x1xf32> to vector<16x32xf32>
    %9 = vector.broadcast %7 : vector<1x32xf32> to vector<16x32xf32>
    %10 = arith.mulf %8, %9 : vector<16x32xf32>
    %11 = arith.addf %5, %10 : vector<16x32xf32>
    %c0_5 = arith.constant 0 : index
    %c0_6 = arith.constant 0 : index
    %12 = vector.load %arg5[%c0_5, %c0_6] : memref<1x32xf32, #tpu.memory_space<vmem>>, vector<1x32xf32>
    %13 = vector.broadcast %12 : vector<1x32xf32> to vector<16x32xf32>
    %14 = arith.addf %11, %13 : vector<16x32xf32>
    %cst = arith.constant 0.000000e+00 : f32
    %15 = vector.broadcast %cst : f32 to vector<16x32xf32>
    %16 = arith.cmpf ogt, %14, %15 : vector<16x32xf32>
    %c0_7 = arith.constant 0 : index
    %c0_8 = arith.constant 0 : index
    %17 = vector.load %arg6[%c0_7, %c0_8] : memref<1x1xf32, #tpu.memory_space<vmem>>, vector<1x1xf32>
    %18 = vector.broadcast %17 : vector<1x1xf32> to vector<16x32xf32>
    %19 = arith.mulf %18, %14 : vector<16x32xf32>
    %20 = arith.select %16, %14, %19 : vector<16x32xi1>, vector<16x32xf32>
    %c0_9 = arith.constant 0 : index
    %c0_10 = arith.constant 0 : index
    %21 = vector.load %arg7[%c0_9, %c0_10] : memref<32x32xf32, #tpu.memory_space<vmem>>, vector<32x32xf32>
    %cst_11 = arith.constant dense<0.000000e+00> : vector<16x32xf32>
    %22 = tpu.matmul %20, %21, %cst_11 {dimension_numbers = #tpu.dot_dimension_numbers<[1], [0], [0], [1], [0, 0, 1, 1], [], []>} : vector<16x32xf32>, vector<32x32xf32>, vector<16x32xf32> -> vector<16x32xf32>
    %c0_12 = arith.constant 0 : index
    %c0_13 = arith.constant 0 : index
    %23 = vector.load %arg8[%c0_12, %c0_13] : memref<1x32xf32, #tpu.memory_space<vmem>>, vector<1x32xf32>
    %24 = vector.broadcast %23 : vector<1x32xf32> to vector<16x32xf32>
    %25 = arith.addf %22, %24 : vector<16x32xf32>
    %cst_14 = arith.constant 6.250000e-02 : f32
    %26 = vector.broadcast %cst_14 : f32 to vector<16x32xf32>
    %27 = arith.mulf %25, %26 : vector<16x32xf32>
    %c0_15 = arith.constant 0 : index
    %c0_16 = arith.constant 0 : index
    %28 = vector.load %arg1[%c0_15, %c0_16] : memref<16x128xf32, #tpu.memory_space<vmem>>, vector<16x128xf32>
    %29 = arith.mulf %28, %28 : vector<16x128xf32>
    %cst_17 = arith.constant dense<0.000000e+00> : vector<16xf32>
    %30 = vector.multi_reduction <add>, %29, %cst_17 [1] : vector<16x128xf32> to vector<16xf32>
    %31 = vector.shape_cast %30 : vector<16xf32> to vector<16x1xf32>
    %cst_18 = arith.constant 9.99999993E-9 : f32
    %32 = vector.broadcast %cst_18 : f32 to vector<16x1xf32>
    %33 = arith.addf %31, %32 : vector<16x1xf32>
    %34 = math.rsqrt %33 : vector<16x1xf32>
    %35 = vector.broadcast %34 : vector<16x1xf32> to vector<16x128xf32>
    %36 = arith.mulf %28, %35 : vector<16x128xf32>
    %cst_19 = arith.constant dense<0.000000e+00> : vector<16x16xf32>
    %37 = tpu.matmul %36, %36, %cst_19 {dimension_numbers = #tpu.dot_dimension_numbers<[1], [1], [0], [0], [0, 0, 1, 0], [], []>} : vector<16x128xf32>, vector<16x128xf32>, vector<16x16xf32> -> vector<16x16xf32>
    %cst_20 = arith.constant dense<0.000000e+00> : vector<16x32xf32>
    %38 = tpu.matmul %37, %27, %cst_20 {dimension_numbers = #tpu.dot_dimension_numbers<[1], [0], [0], [1], [0, 0, 1, 1], [], []>} : vector<16x16xf32>, vector<16x32xf32>, vector<16x32xf32> -> vector<16x32xf32>
    %c0_21 = arith.constant 0 : index
    %c0_22 = arith.constant 0 : index
    %39 = vector.load %arg2[%c0_21, %c0_22] : memref<16x64xf32, #tpu.memory_space<vmem>>, vector<16x64xf32>
    %40 = arith.mulf %39, %39 : vector<16x64xf32>
    %cst_23 = arith.constant dense<0.000000e+00> : vector<16xf32>
    %41 = vector.multi_reduction <add>, %40, %cst_23 [1] : vector<16x64xf32> to vector<16xf32>
    %42 = vector.shape_cast %41 : vector<16xf32> to vector<16x1xf32>
    %cst_24 = arith.constant 9.99999993E-9 : f32
    %43 = vector.broadcast %cst_24 : f32 to vector<16x1xf32>
    %44 = arith.addf %42, %43 : vector<16x1xf32>
    %45 = math.rsqrt %44 : vector<16x1xf32>
    %46 = vector.broadcast %45 : vector<16x1xf32> to vector<16x64xf32>
    %47 = arith.mulf %39, %46 : vector<16x64xf32>
    %cst_25 = arith.constant dense<0.000000e+00> : vector<16x16xf32>
    %48 = tpu.matmul %47, %47, %cst_25 {dimension_numbers = #tpu.dot_dimension_numbers<[1], [1], [0], [0], [0, 0, 1, 0], [], []>} : vector<16x64xf32>, vector<16x64xf32>, vector<16x16xf32> -> vector<16x16xf32>
    %cst_26 = arith.constant dense<0.000000e+00> : vector<16x32xf32>
    %49 = tpu.matmul %48, %27, %cst_26 {dimension_numbers = #tpu.dot_dimension_numbers<[1], [0], [0], [1], [0, 0, 1, 1], [], []>} : vector<16x16xf32>, vector<16x32xf32>, vector<16x32xf32> -> vector<16x32xf32>
    %c0_27 = arith.constant 0 : index
    %c0_28 = arith.constant 0 : index
    %50 = vector.load %arg9[%c0_27, %c0_28] : memref<32x1xf32, #tpu.memory_space<vmem>>, vector<32x1xf32>
    %cst_29 = arith.constant dense<0.000000e+00> : vector<16x1xf32>
    %51 = tpu.matmul %25, %50, %cst_29 {dimension_numbers = #tpu.dot_dimension_numbers<[1], [0], [0], [1], [0, 0, 1, 1], [], []>} : vector<16x32xf32>, vector<32x1xf32>, vector<16x1xf32> -> vector<16x1xf32>
    %c0_30 = arith.constant 0 : index
    %c0_31 = arith.constant 0 : index
    %52 = vector.load %arg10[%c0_30, %c0_31] : memref<32x1xf32, #tpu.memory_space<vmem>>, vector<32x1xf32>
    %cst_32 = arith.constant dense<0.000000e+00> : vector<16x1xf32>
    %53 = tpu.matmul %38, %52, %cst_32 {dimension_numbers = #tpu.dot_dimension_numbers<[1], [0], [0], [1], [0, 0, 1, 1], [], []>} : vector<16x32xf32>, vector<32x1xf32>, vector<16x1xf32> -> vector<16x1xf32>
    %54 = arith.addf %51, %53 : vector<16x1xf32>
    %c0_33 = arith.constant 0 : index
    %c0_34 = arith.constant 0 : index
    %55 = vector.load %arg11[%c0_33, %c0_34] : memref<32x1xf32, #tpu.memory_space<vmem>>, vector<32x1xf32>
    %cst_35 = arith.constant dense<0.000000e+00> : vector<16x1xf32>
    %56 = tpu.matmul %49, %55, %cst_35 {dimension_numbers = #tpu.dot_dimension_numbers<[1], [0], [0], [1], [0, 0, 1, 1], [], []>} : vector<16x32xf32>, vector<32x1xf32>, vector<16x1xf32> -> vector<16x1xf32>
    %57 = arith.addf %54, %56 : vector<16x1xf32>
    %c0_36 = arith.constant 0 : index
    %c0_37 = arith.constant 0 : index
    %58 = vector.load %arg12[%c0_36, %c0_37] : memref<1x1xf32, #tpu.memory_space<vmem>>, vector<1x1xf32>
    %59 = vector.broadcast %58 : vector<1x1xf32> to vector<16x1xf32>
    %60 = arith.addf %57, %59 : vector<16x1xf32>
    %c0_38 = arith.constant 0 : index
    %c0_39 = arith.constant 0 : index
    %61 = vector.load %arg13[%c0_38, %c0_39] : memref<16x1xf32, #tpu.memory_space<vmem>>, vector<16x1xf32>
    tpu.vector_store %arg13[%c0_38, %c0_39], %60 {strides = array<i32>} : memref<16x1xf32, #tpu.memory_space<vmem>>, vector<16x1xf32>,
    return
  }
}

</mosaic_0001>

<llo_original>
// kernel: gcn1_forward.1
$region0: #{gcn1_forward.1}
  #allocation0 [shape = 'u32[]', space=smem, size = 0x4, offset = 0x4, fixed_abs, tag = 'smem constant byte address 0x4 - core index']
  #allocation1 [shape = 'u32[72,128]{1,0:T(1,128)}', space=vmem, size = 0x9000, scoped, tag = 'internal scratch']
  #allocation2 [shape = 'f32[1,1]{1,0:T(1,128)S(1)}', space=vmem, size = 0x200, scoped, tag = 'scoped memory for gcn1_forward.1']
  #allocation3 [shape = 'f32[1,1]{1,0:T(1,128)S(1)}', space=vmem, size = 0x200, scoped, tag = 'scoped memory for gcn1_forward.1']
  %s0 = inlined_call_operand.vmem [shape: f32[16,2], index: 0, kind: input, shape index: {}]
  %s1 = inlined_call_operand.vmem [shape: f32[16,128], index: 1, kind: input, shape index: {}]
  %s2 = inlined_call_operand.vmem [shape: f32[16,64], index: 2, kind: input, shape index: {}]
  %s3 = inlined_call_operand.vmem [shape: f32[1,32], index: 3, kind: input, shape index: {}]
  %s4 = inlined_call_operand.vmem [shape: f32[1,32], index: 4, kind: input, shape index: {}]
  %s5 = inlined_call_operand.vmem [shape: f32[1,32], index: 5, kind: input, shape index: {}]
  %s6 = inlined_call_operand.<no memory space> [shape: f32[1,1], index: 6, kind: input, shape index: {}]
  %s7 = inlined_call_operand.vmem [shape: f32[32,32], index: 7, kind: input, shape index: {}]
  %s8 = inlined_call_operand.vmem [shape: f32[1,32], index: 8, kind: input, shape index: {}]
  %s9 = inlined_call_operand.vmem [shape: f32[32,1], index: 9, kind: input, shape index: {}]
  %s10 = inlined_call_operand.vmem [shape: f32[32,1], index: 10, kind: input, shape index: {}]
  %s11 = inlined_call_operand.vmem [shape: f32[32,1], index: 11, kind: input, shape index: {}]
  %s12 = inlined_call_operand.<no memory space> [shape: f32[1,1], index: 12, kind: input, shape index: {}]
  %s13 = inlined_call_operand.vmem [shape: f32[16,1], index: 13, kind: output, shape index: {}]
  %s14 = sld [smem:[#allocation0]]
  $region62: #{gcn1_forward.1} parent=0
    _
  %s16 = ssub.s32 1, %s14
  %s17 = scalar_select 0, %s16, %s14
  %v18 = vstv %s6
  %19 = vst [vmem:[#allocation2] sm:$0x1] %v18
  %v20 = vstv %s12
  %21 = vst [vmem:[#allocation3] sm:$0x1] %v20
  // Predicated region
  $region2: #{gcn1_forward.1} parent=0 // pred_check
    _
  $region3: #{gcn1_forward.1} parent=0 // pred_check_branch
    %23 = sbr.rel (0) target = $region5
  $region4: #{gcn1_forward.1} parent=0 // pred_region
    _
  $region5: #{gcn1_forward.1} parent=0 // pred_fallthru
    _
  // Predicated region
  $region6: #{gcn1_forward.1} parent=0 // pred_check
    _
  $region7: #{gcn1_forward.1} parent=0 // pred_check_branch
    %25 = sbr.rel (0) target = $region9
  $region8: #{gcn1_forward.1} parent=0 // pred_region
    _
  $region9: #{gcn1_forward.1} parent=0 // pred_fallthru
    _
  // Predicated region
  $region10: #{gcn1_forward.1} parent=0 // pred_check
    _
  $region11: #{gcn1_forward.1} parent=0 // pred_check_branch
    %27 = sbr.rel (0) target = $region13
  $region12: #{gcn1_forward.1} parent=0 // pred_region
    _
  $region13: #{gcn1_forward.1} parent=0 // pred_fallthru
    _
  // Predicated region
  $region14: #{gcn1_forward.1} parent=0 // pred_check
    _
  $region15: #{gcn1_forward.1} parent=0 // pred_check_branch
    %29 = sbr.rel (0) target = $region17
  $region16: #{gcn1_forward.1} parent=0 // pred_region
    _
  $region17: #{gcn1_forward.1} parent=0 // pred_fallthru
    _
  // Predicated region
  $region18: #{gcn1_forward.1} parent=0 // pred_check
    _
  $region19: #{gcn1_forward.1} parent=0 // pred_check_branch
    %31 = sbr.rel (0) target = $region21
  $region20: #{gcn1_forward.1} parent=0 // pred_region
    _
  $region21: #{gcn1_forward.1} parent=0 // pred_fallthru
    _
  // Predicated region
  $region22: #{gcn1_forward.1} parent=0 // pred_check
    _
  $region23: #{gcn1_forward.1} parent=0 // pred_check_branch
    %33 = sbr.rel (0) target = $region25
  $region24: #{gcn1_forward.1} parent=0 // pred_region
    _
  $region25: #{gcn1_forward.1} parent=0 // pred_fallthru
    _
  // Predicated region
  $region26: #{gcn1_forward.1} parent=0 // pred_check
    _
  $region27: #{gcn1_forward.1} parent=0 // pred_check_branch
    %35 = sbr.rel (0) target = $region29
  $region28: #{gcn1_forward.1} parent=0 // pred_region
    _
  $region29: #{gcn1_forward.1} parent=0 // pred_fallthru
    _
  // Predicated region
  $region30: #{gcn1_forward.1} parent=0 // pred_check
    _
  $region31: #{gcn1_forward.1} parent=0 // pred_check_branch
    %37 = sbr.rel (0) target = $region33
  $region32: #{gcn1_forward.1} parent=0 // pred_region
    _
  $region33: #{gcn1_forward.1} parent=0 // pred_fallthru
    _
  // Predicated region
  $region34: #{gcn1_forward.1} parent=0 // pred_check
    _
  $region35: #{gcn1_forward.1} parent=0 // pred_check_branch
    %39 = sbr.rel (0) target = $region37
  $region36: #{gcn1_forward.1} parent=0 // pred_region
    _
  $region37: #{gcn1_forward.1} parent=0 // pred_fallthru
    _
  // Predicated region
  $region38: #{gcn1_forward.1} parent=0 // pred_check
    _
  $region39: #{gcn1_forward.1} parent=0 // pred_check_branch
    %41 = sbr.rel (0) target = $region41
  $region40: #{gcn1_forward.1} parent=0 // pred_region
    _
  $region41: #{gcn1_forward.1} parent=0 // pred_fallthru
    _
  // Predicated region
  $region42: #{gcn1_forward.1} parent=0 // pred_check
    _
  $region43: #{gcn1_forward.1} parent=0 // pred_check_branch
    %43 = sbr.rel (0) target = $region45
  $region44: #{gcn1_forward.1} parent=0 // pred_region
    _
  $region45: #{gcn1_forward.1} parent=0 // pred_fallthru
    _
  // Predicated region
  $region46: #{gcn1_forward.1} parent=0 // pred_check
    _
  $region47: #{gcn1_forward.1} parent=0 // pred_check_branch
    %45 = sbr.rel (0) target = $region49
  $region48: #{gcn1_forward.1} parent=0 // pred_region
    _
  $region49: #{gcn1_forward.1} parent=0 // pred_fallthru
    _
  // Predicated region
  $region50: #{gcn1_forward.1} parent=0 // pred_check
    _
  $region51: #{gcn1_forward.1} parent=0 // pred_check_branch
    %47 = sbr.rel (0) target = $region53
  $region52: #{gcn1_forward.1} parent=0 // pred_region
    _
  $region53: #{gcn1_forward.1} parent=0 // pred_fallthru
    _
  %v48 = vld [vmem:[%s0] sm:$0xff]
  %v49 = vld [vmem:[%s0 + $0x8] sm:$0xff]
  %v50 = vld [vmem:[%s3] sm:$0x1]
  %52 = vset.pattern.permute.xlu0 0
  %53 = vperm.xlu0 %52, %v48
  %v54 = vpop.permute.xlu0 %53
  %57 = vset.pattern.permute.xlu0 0
  %58 = vperm.xlu0 %57, %v49
  %v59 = vpop.permute.xlu0 %58
  %v62 = vperm.slane %v50, 0
  %v64 = vmul.f32 %v54, %v62
  %v65 = vmul.f32 %v59, %v62
  %v66 = vld [vmem:[%s4] sm:$0x1]
  %67 = vset.pattern.permute.xlu0 1
  %68 = vperm.xlu0 %67, %v48
  %v69 = vpop.permute.xlu0 %68
  %71 = vset.pattern.permute.xlu0 1
  %72 = vperm.xlu0 %71, %v49
  %v73 = vpop.permute.xlu0 %72
  %v76 = vperm.slane %v66, 0
  %v78 = vmul.f32 %v69, %v76
  %v79 = vmul.f32 %v73, %v76
  %v80 = vadd.f32 %v64, %v78
  %v81 = vadd.f32 %v65, %v79
  %v82 = vld [vmem:[%s5] sm:$0x1]
  %v84 = vperm.slane %v82, 0
  %v86 = vadd.f32 %v80, %v84
  %v87 = vadd.f32 %v81, %v84
  %vm88 = vcmp.gt.f32.partialorder %v86, 0.0
  %vm89 = vcmp.gt.f32.partialorder %v87, 0.0
  %v90 = vld [vmem:[#allocation2] sm:$0x1]
  %v92 = vperm.slane %v90, 0
  %93 = vset.pattern.permute.xlu0 0
  %94 = vperm.xlu0 %93, %v92
  %v95 = vpop.permute.xlu0 %94
  %v97 = vmul.f32 %v95, %v86
  %v98 = vmul.f32 %v95, %v87
  %v99 = vsel %vm88, %v86, %v97
  %v100 = vsel %vm89, %v87, %v98
  %v101 = vld [vmem:[%s7] sm:$0xff]
  %v102 = vld [vmem:[%s7 + $0x8] sm:$0xff]
  %v103 = vld [vmem:[%s7 + $0x10] sm:$0xff]
  %v104 = vld [vmem:[%s7 + $0x18] sm:$0xff]
  %v105 = vld [vmem:[%s8] sm:$0x1]
  %v107 = vperm.slane %v105, 0
  %vm109 = vcmask 261120
  %v111 = vsel %vm109, %v99, 0
  %v114 = vsel %vm109, %v100, 0
  %116 = vmatpush.msra.mxu0 0.0
  %117 = vmatpush.msra.mxu0 0.0
  %118 = vmatpush.msra.mxu0 0.0
  %119 = vmatpush.msra.mxu0 0.0
  %120 = vmatpush.msra.mxu0 0.0
  %121 = vmatpush.msra.mxu0 0.0
  %122 = vmatpush.msra.mxu0 0.0
  %123 = vmatpush.msra.mxu0 0.0
  %124 = vmatpush.msra.mxu0 0.0
  %125 = vmatpush.msra.mxu0 0.0
  %126 = vmatpush.msra.mxu0 0.0
  %127 = vmatpush.msra.mxu0 0.0
  %128 = vmatpush.msra.mxu0 %v104
  %129 = vmatpush.msra.mxu0 %v103
  %130 = vmatpush.msra.mxu0 %v102
  %131 = vmatpush.msra.mxu0 %v101
  %132 = vmatmul.f32.gmra.mxu0 %v111
  %v133 = vpop.f32.mrf.mxu0
  %v134 = vadd.f32 %v107, %v133
  %135 = vmatmul.f32.gmra.mxu0 %v114
  %v136 = vpop.f32.mrf.mxu0
  %v137 = vadd.f32 %v107, %v136
  %138 = vdwg.mxu0
  %v139 = vmul.f32 %v134, 0.0625
  %v140 = vmul.f32 %v137, 0.0625
  %v141 = vld [vmem:[%s1] sm:$0xff]
  %v142 = vld [vmem:[%s1 + $0x8] sm:$0xff]
  %v143 = vmul.f32 %v141, %v141
  %v144 = vmul.f32 %v142, %v142
  %145 = vadd.xlane.f32.xlu0 %v143
  %v146 = vpop.xlane.xlu0 %145
  %147 = vadd.xlane.f32.xlu0 %v144
  %v148 = vpop.xlane.xlu0 %147
  %v149 = vadd.f32 %v146, 1e-08
  %v150 = vadd.f32 %v148, 1e-08
  %v151 = vrsqrt.pop %v149
  %v152 = vmul.f32 %v151, %v149
  %v153 = vmul.f32 %v152, %v151
  %v154 = vmul.f32 0.5, %v153
  %v155 = vsub.f32 1.5, %v154
  %v156 = vmul.f32 %v151, %v155
  %vm157 = vweird.f32 %v149
  %vm158 = vweird.f32 %v151
  %vm159 = vmor %vm157, %vm158
  %v160 = vsel %vm159, %v151, %v156
  %v161 = vrsqrt.pop %v150
  %v162 = vmul.f32 %v161, %v150
  %v163 = vmul.f32 %v162, %v161
  %v164 = vmul.f32 0.5, %v163
  %v165 = vsub.f32 1.5, %v164
  %v166 = vmul.f32 %v161, %v165
  %vm167 = vweird.f32 %v150
  %vm168 = vweird.f32 %v161
  %vm169 = vmor %vm167, %vm168
  %v170 = vsel %vm169, %v161, %v166
  %v171 = vmul.f32 %v141, %v160
  %v172 = vmul.f32 %v142, %v170
  %173 = vmatpush.xpose.msra.mxu0 0.0
  %174 = vmatpush.xpose.msra.mxu0 0.0
  %175 = vmatpush.xpose.msra.mxu0 0.0
  %176 = vmatpush.xpose.msra.mxu0 0.0
  %177 = vmatpush.xpose.msra.mxu0 0.0
  %178 = vmatpush.xpose.msra.mxu0 0.0
  %179 = vmatpush.xpose.msra.mxu0 0.0
  %180 = vmatpush.xpose.msra.mxu0 0.0
  %181 = vmatpush.xpose.msra.mxu0 0.0
  %182 = vmatpush.xpose.msra.mxu0 0.0
  %183 = vmatpush.xpose.msra.mxu0 0.0
  %184 = vmatpush.xpose.msra.mxu0 0.0
  %185 = vmatpush.xpose.msra.mxu0 0.0
  %186 = vmatpush.xpose.msra.mxu0 0.0
  %187 = vmatpush.xpose.msra.mxu0 %v172
  %188 = vmatpush.xpose.msra.mxu0 %v171
  %189 = vmatmul.f32.gmra.mxu0 %v171
  %v190 = vpop.f32.mrf.mxu0
  %v191 = vadd.f32 0.0, %v190
  %192 = vmatmul.f32.gmra.mxu0 %v172
  %v193 = vpop.f32.mrf.mxu0
  %v194 = vadd.f32 0.0, %v193
  %195 = vdwg.mxu0
  %vm196 = vcmask 130048
  %v198 = vsel %vm196, %v191, 0
  %v201 = vsel %vm196, %v194, 0
  %203 = vmatpush.msra.mxu0 0.0
  %204 = vmatpush.msra.mxu0 0.0
  %205 = vmatpush.msra.mxu0 0.0
  %206 = vmatpush.msra.mxu0 0.0
  %207 = vmatpush.msra.mxu0 0.0
  %208 = vmatpush.msra.mxu0 0.0
  %209 = vmatpush.msra.mxu0 0.0
  %210 = vmatpush.msra.mxu0 0.0
  %211 = vmatpush.msra.mxu0 0.0
  %212 = vmatpush.msra.mxu0 0.0
  %213 = vmatpush.msra.mxu0 0.0
  %214 = vmatpush.msra.mxu0 0.0
  %215 = vmatpush.msra.mxu0 0.0
  %216 = vmatpush.msra.mxu0 0.0
  %217 = vmatpush.msra.mxu0 %v140
  %218 = vmatpush.msra.mxu0 %v139
  %219 = vmatmul.f32.gmra.mxu0 %v198
  %v220 = vpop.f32.mrf.mxu0
  %v221 = vadd.f32 0.0, %v220
  %222 = vmatmul.f32.gmra.mxu0 %v201
  %v223 = vpop.f32.mrf.mxu0
  %v224 = vadd.f32 0.0, %v223
  %225 = vdwg.mxu0
  %v226 = vld [vmem:[%s2] sm:$0xff]
  %v227 = vld [vmem:[%s2 + $0x8] sm:$0xff]
  %v228 = vmul.f32 %v226, %v226
  %v229 = vmul.f32 %v227, %v227
  %vm230 = vcmask 523264
  %v231 = vsel %vm230, %v228, 0.0
  %232 = vadd.xlane.f32.xlu0 %v231
  %v233 = vpop.xlane.xlu0 %232
  %v234 = vsel %vm230, %v229, 0.0
  %235 = vadd.xlane.f32.xlu0 %v234
  %v236 = vpop.xlane.xlu0 %235
  %v237 = vadd.f32 %v233, 1e-08
  %v238 = vadd.f32 %v236, 1e-08
  %v239 = vrsqrt.pop %v237
  %v240 = vmul.f32 %v239, %v237
  %v241 = vmul.f32 %v240, %v239
  %v242 = vmul.f32 0.5, %v241
  %v243 = vsub.f32 1.5, %v242
  %v244 = vmul.f32 %v239, %v243
  %vm245 = vweird.f32 %v237
  %vm246 = vweird.f32 %v239
  %vm247 = vmor %vm245, %vm246
  %v248 = vsel %vm247, %v239, %v244
  %v249 = vrsqrt.pop %v238
  %v250 = vmul.f32 %v249, %v238
  %v251 = vmul.f32 %v250, %v249
  %v252 = vmul.f32 0.5, %v251
  %v253 = vsub.f32 1.5, %v252
  %v254 = vmul.f32 %v249, %v253
  %vm255 = vweird.f32 %v238
  %vm256 = vweird.f32 %v249
  %vm257 = vmor %vm255, %vm256
  %v258 = vsel %vm257, %v249, %v254
  %v259 = vmul.f32 %v226, %v248
  %v260 = vmul.f32 %v227, %v258
  %v262 = vsel %vm230, %v259, 0
  %v265 = vsel %vm230, %v260, 0
  %267 = vmatpush.xpose.msra.mxu0 0.0
  %268 = vmatpush.xpose.msra.mxu0 0.0
  %269 = vmatpush.xpose.msra.mxu0 0.0
  %270 = vmatpush.xpose.msra.mxu0 0.0
  %271 = vmatpush.xpose.msra.mxu0 0.0
  %272 = vmatpush.xpose.msra.mxu0 0.0
  %273 = vmatpush.xpose.msra.mxu0 0.0
  %274 = vmatpush.xpose.msra.mxu0 0.0
  %275 = vmatpush.xpose.msra.mxu0 0.0
  %276 = vmatpush.xpose.msra.mxu0 0.0
  %277 = vmatpush.xpose.msra.mxu0 0.0
  %278 = vmatpush.xpose.msra.mxu0 0.0
  %279 = vmatpush.xpose.msra.mxu0 0.0
  %280 = vmatpush.xpose.msra.mxu0 0.0
  %281 = vmatpush.xpose.msra.mxu0 %v265
  %282 = vmatpush.xpose.msra.mxu0 %v262
  %283 = vmatmul.f32.gmra.mxu0 %v262
  %v284 = vpop.f32.mrf.mxu0
  %v285 = vadd.f32 0.0, %v284
  %286 = vmatmul.f32.gmra.mxu0 %v265
  %v287 = vpop.f32.mrf.mxu0
  %v288 = vadd.f32 0.0, %v287
  %289 = vdwg.mxu0
  %v291 = vsel %vm196, %v285, 0
  %v294 = vsel %vm196, %v288, 0
  %296 = vmatpush.msra.mxu0 0.0
  %297 = vmatpush.msra.mxu0 0.0
  %298 = vmatpush.msra.mxu0 0.0
  %299 = vmatpush.msra.mxu0 0.0
  %300 = vmatpush.msra.mxu0 0.0
  %301 = vmatpush.msra.mxu0 0.0
  %302 = vmatpush.msra.mxu0 0.0
  %303 = vmatpush.msra.mxu0 0.0
  %304 = vmatpush.msra.mxu0 0.0
  %305 = vmatpush.msra.mxu0 0.0
  %306 = vmatpush.msra.mxu0 0.0
  %307 = vmatpush.msra.mxu0 0.0
  %308 = vmatpush.msra.mxu0 0.0
  %309 = vmatpush.msra.mxu0 0.0
  %310 = vmatpush.msra.mxu0 %v140
  %311 = vmatpush.msra.mxu0 %v139
  %312 = vmatmul.f32.gmra.mxu0 %v291
  %v313 = vpop.f32.mrf.mxu0
  %v314 = vadd.f32 0.0, %v313
  %315 = vmatmul.f32.gmra.mxu0 %v294
  %v316 = vpop.f32.mrf.mxu0
  %v317 = vadd.f32 0.0, %v316
  %318 = vdwg.mxu0
  %v319 = vld [vmem:[%s9] sm:$0xff]
  %v320 = vld [vmem:[%s9 + $0x8] sm:$0xff]
  %v321 = vld [vmem:[%s9 + $0x10] sm:$0xff]
  %v322 = vld [vmem:[%s9 + $0x18] sm:$0xff]
  %v323 = vld [vmem:[%s10] sm:$0xff]
  %v324 = vld [vmem:[%s10 + $0x8] sm:$0xff]
  %v325 = vld [vmem:[%s10 + $0x10] sm:$0xff]
  %v326 = vld [vmem:[%s10 + $0x18] sm:$0xff]
  %v328 = vsel %vm109, %v221, 0
  %v331 = vsel %vm109, %v224, 0
  %333 = vmatpush.msra.mxu0 0.0
  %334 = vmatpush.msra.mxu0 0.0
  %335 = vmatpush.msra.mxu0 0.0
  %336 = vmatpush.msra.mxu0 0.0
  %337 = vmatpush.msra.mxu0 0.0
  %338 = vmatpush.msra.mxu0 0.0
  %339 = vmatpush.msra.mxu0 0.0
  %340 = vmatpush.msra.mxu0 0.0
  %341 = vmatpush.msra.mxu0 0.0
  %342 = vmatpush.msra.mxu0 0.0
  %343 = vmatpush.msra.mxu0 0.0
  %344 = vmatpush.msra.mxu0 0.0
  %345 = vmatpush.msra.mxu0 %v326
  %346 = vmatpush.msra.mxu0 %v325
  %347 = vmatpush.msra.mxu0 %v324
  %348 = vmatpush.msra.mxu0 %v323
  %349 = vmatmul.f32.gmra.mxu0 %v328
  %v350 = vpop.f32.mrf.mxu0
  %v351 = vadd.f32 0.0, %v350
  %352 = vmatmul.f32.gmra.mxu0 %v331
  %v353 = vpop.f32.mrf.mxu0
  %v354 = vadd.f32 0.0, %v353
  %355 = vdwg.mxu0
  %v357 = vsel %vm109, %v134, 0
  %v360 = vsel %vm109, %v137, 0
  %362 = vmatpush.msra.mxu0 0.0
  %363 = vmatpush.msra.mxu0 0.0
  %364 = vmatpush.msra.mxu0 0.0
  %365 = vmatpush.msra.mxu0 0.0
  %366 = vmatpush.msra.mxu0 0.0
  %367 = vmatpush.msra.mxu0 0.0
  %368 = vmatpush.msra.mxu0 0.0
  %369 = vmatpush.msra.mxu0 0.0
  %370 = vmatpush.msra.mxu0 0.0
  %371 = vmatpush.msra.mxu0 0.0
  %372 = vmatpush.msra.mxu0 0.0
  %373 = vmatpush.msra.mxu0 0.0
  %374 = vmatpush.msra.mxu0 %v322
  %375 = vmatpush.msra.mxu0 %v321
  %376 = vmatpush.msra.mxu0 %v320
  %377 = vmatpush.msra.mxu0 %v319
  %378 = vmatmul.f32.gmra.mxu0 %v357
  %v379 = vpop.f32.mrf.mxu0
  %v380 = vadd.f32 %v351, %v379
  %381 = vmatmul.f32.gmra.mxu0 %v360
  %v382 = vpop.f32.mrf.mxu0
  %v383 = vadd.f32 %v354, %v382
  %384 = vdwg.mxu0
  %v385 = vld [vmem:[%s11] sm:$0xff]
  %v386 = vld [vmem:[%s11 + $0x8] sm:$0xff]
  %v387 = vld [vmem:[%s11 + $0x10] sm:$0xff]
  %v388 = vld [vmem:[%s11 + $0x18] sm:$0xff]
  %v390 = vsel %vm109, %v314, 0
  %v393 = vsel %vm109, %v317, 0
  %395 = vmatpush.msra.mxu0 0.0
  %396 = vmatpush.msra.mxu0 0.0
  %397 = vmatpush.msra.mxu0 0.0
  %398 = vmatpush.msra.mxu0 0.0
  %399 = vmatpush.msra.mxu0 0.0
  %400 = vmatpush.msra.mxu0 0.0
  %401 = vmatpush.msra.mxu0 0.0
  %402 = vmatpush.msra.mxu0 0.0
  %403 = vmatpush.msra.mxu0 0.0
  %404 = vmatpush.msra.mxu0 0.0
  %405 = vmatpush.msra.mxu0 0.0
  %406 = vmatpush.msra.mxu0 0.0
  %407 = vmatpush.msra.mxu0 %v388
  %408 = vmatpush.msra.mxu0 %v387
  %409 = vmatpush.msra.mxu0 %v386
  %410 = vmatpush.msra.mxu0 %v385
  %411 = vmatmul.f32.gmra.mxu0 %v390
  %v412 = vpop.f32.mrf.mxu0
  %v413 = vadd.f32 0.0, %v412
  %414 = vmatmul.f32.gmra.mxu0 %v393
  %v415 = vpop.f32.mrf.mxu0
  %v416 = vadd.f32 0.0, %v415
  %417 = vdwg.mxu0
  %v418 = vadd.f32 %v380, %v413
  %v419 = vadd.f32 %v383, %v416
  %v420 = vld [vmem:[#allocation3] sm:$0x1]
  %v422 = vperm.slane %v420, 0
  %v424 = vadd.f32 %v418, %v422
  %v425 = vadd.f32 %v419, %v422
  %vm426 = vcmask 7168
  %427 = vst.msk [vmem:[%s13] sm:$0xff] %vm426, %v424
  %428 = vst.msk [vmem:[%s13 + $0x8] sm:$0xff] %vm426, %v425
  // Predicated region
  $region54: #{gcn1_forward.1} parent=0 // pred_check
    _
  $region55: #{gcn1_forward.1} parent=0 // pred_check_branch
    %430 = sbr.rel (0) target = $region57
  $region56: #{gcn1_forward.1} parent=0 // pred_region
    _
  $region57: #{gcn1_forward.1} parent=0 // pred_fallthru
    _
  // Predicated region
  $region58: #{gcn1_forward.1} parent=0 // pred_check
    _
  $region59: #{gcn1_forward.1} parent=0 // pred_check_branch
    %432 = sbr.rel (0) target = $region61
  $region60: #{gcn1_forward.1} parent=0 // pred_region
    _
  $region61: #{gcn1_forward.1} parent=0 // pred_fallthru
    _

</llo_original>
